<compile_context>
chip_gen: v7x
topology: tpu7x:2x2x1
jax: 0.10.0
libtpu: 0.0.40
codegen_flags: <defaults>
</compile_context>

<pallas_src>
import functools

import jax
import jax.numpy as jnp
from jax.experimental import pallas as pl
from jax.experimental.pallas import tpu as pltpu


# ---------------------------------------------------------------------------
# Kernels
# ---------------------------------------------------------------------------

def _mrmsnorm_kernel(x_ref, w_ref, o_ref, *, eps, inv_n):
    """Single-pass: (tb, N) block holds whole flattened rows; w_ref is (1, N)."""
    x = x_ref[...].astype(jnp.float32)                    # f32 accumulation
    ms = jnp.sum(x * x, axis=-1, keepdims=True) * inv_n   # (tb, 1) mean(x^2)
    inv = jax.lax.rsqrt(ms + eps)                         # EUP rsqrt
    y = (x * inv).astype(o_ref.dtype)                     # torch: norm in f32, cast back
    o_ref[...] = y * w_ref[...]                           # weight pre-cast to x.dtype


def _sumsq_kernel(x_ref, inv_ref, acc_ref, *, eps, inv_n):
    """Two-pass, pass A: accumulate per-row sum(x^2) over N chunks -> inv RMS."""
    n = pl.program_id(1)

    @pl.when(n == 0)
    def _():
        acc_ref[...] = jnp.zeros_like(acc_ref)

    x = x_ref[...].astype(jnp.float32)
    acc_ref[...] += jnp.sum(x * x, axis=-1, keepdims=True)

    @pl.when(n == pl.num_programs(1) - 1)
    def _():
        inv_ref[...] = jax.lax.rsqrt(acc_ref[...] * inv_n + eps)


def _scale_kernel(x_ref, inv_ref, w_ref, o_ref):
    """Two-pass, pass B: y = (x_f32 * inv).astype(dtype) * w."""
    x = x_ref[...].astype(jnp.float32)
    y = (x * inv_ref[...]).astype(o_ref.dtype)
    o_ref[...] = y * w_ref[...]


# ---------------------------------------------------------------------------
# VMEM budgeting / tiling heuristics
# ---------------------------------------------------------------------------

def _vmem_capacity_bytes():
    """Physical per-core VMEM; falls back to the most conservative (v7x)."""
    try:
        info = pltpu.get_tpu_info()
        for attr in ("vmem_capacity_bytes", "vmem_bytes"):
            cap = getattr(info, attr, None)
            if cap:
                return int(cap)
    except Exception:
        pass
    return 64 << 20


def _budgets():
    """(per-step block budget, scoped-VMEM-limit cap) for this generation."""
    cap = _vmem_capacity_bytes()
    if cap >= (100 << 20):            # v5e / v6e: 128 MiB physical VMEM
        return 44 << 20, 100 << 20
    return 14 << 20, 48 << 20         # v7x: 64 MiB physical VMEM


def _pick_block_rows(batch, rows_fit):
    """Rows per grid step: a legal divisor of batch (multiple of 8 or the full
    batch) within the VMEM budget, preferring an even grid with >= 2 steps
    (megacore), then the largest tb (fewer grid steps / DMA descriptors)."""
    legal = [t for t in range(1, batch + 1)
             if batch % t == 0 and (t % 8 == 0 or t == batch)]
    fitting = [t for t in legal if t <= rows_fit] or [min(legal)]

    def score(t):
        steps = batch // t
        return (steps >= 2 and steps % 2 == 0, steps >= 2, t)

    return max(fitting, key=score)


def _pick_n_tile(n, rows, bytes_per_elem, budget):
    """Largest multiple-of-128 divisor of n giving >= 2 chunks inside budget."""
    best = 128
    t = 128
    while t <= n // 2:
        if n % t == 0 and rows * t * bytes_per_elem <= budget:
            best = t
        t += 128
    return best


# ---------------------------------------------------------------------------
# pallas_call wrappers
# ---------------------------------------------------------------------------

def _single_pass(x2, w_row, tb, eps, vmem_cap):
    B, N = x2.shape
    itemsize = jnp.dtype(x2.dtype).itemsize
    grid = (B // tb,)

    block_bytes = tb * N * itemsize
    w_bytes = N * itemsize
    # in + out double-buffered, resident weight row, f32 temporaries, headroom.
    vmem_needed = 4 * block_bytes + 2 * w_bytes + 3 * tb * N * 4 + (4 << 20)
    vmem_limit = int(min(max(vmem_needed, 16 << 20), vmem_cap))

    kernel = functools.partial(_mrmsnorm_kernel, eps=float(eps), inv_n=1.0 / N)
    cost = pl.CostEstimate(
        flops=4 * B * N,                 # square, reduce-add, normalize, gain
        transcendentals=B,               # one rsqrt per sample
        bytes_accessed=2 * B * N * itemsize + w_bytes,
    )

    def call(w_spec):
        return pl.pallas_call(
            kernel,
            out_shape=jax.ShapeDtypeStruct((B, N), x2.dtype),
            grid_spec=pltpu.PrefetchScalarGridSpec(
                num_scalar_prefetch=0,
                grid=grid,
                in_specs=[pl.BlockSpec((tb, N), lambda b: (b, 0)), w_spec],
                out_specs=pl.BlockSpec((tb, N), lambda b: (b, 0)),
            ),
            compiler_params=pltpu.CompilerParams(
                dimension_semantics=("parallel",),
                vmem_limit_bytes=vmem_limit,
            ),
            cost_estimate=cost,
        )(x2, w_row)

    try:
        # Grid-invariant weight row: single-buffer it (frees N*itemsize VMEM
        # for a larger row block; never re-fetched).
        return call(pl.BlockSpec((1, N), lambda b: (0, 0),
                                 pipeline_mode=pl.Buffered(1)))
    except Exception:
        # TODO(synk): pipeline_mode=pl.Buffered(1) unsupported on this JAX
        # build; fall back to the default double-buffered resident row.
        return call(pl.BlockSpec((1, N), lambda b: (0, 0)))


def _two_pass(x2, w_row, eps, block_budget, vmem_cap):
    """N-tiled two-pass path for small-batch / huge-N inputs."""
    B, N = x2.shape
    itemsize = jnp.dtype(x2.dtype).itemsize
    # Keep all rows per block when the batch is small, else tile by sublanes.
    tbr = B if (B <= 8 or B % 8 != 0) else 8
    tn = _pick_n_tile(N, tbr, 4 * itemsize + 4, block_budget)
    grid = (B // tbr, N // tn)
    blk = tbr * tn * itemsize
    inv_n = 1.0 / N

    # ---- pass A: per-row sum of squares -> inverse RMS ----------------------
    need_a = 2 * blk + tbr * tn * 4 + 4 * tbr * 4 + (2 << 20)
    inv = pl.pallas_call(
        functools.partial(_sumsq_kernel, eps=float(eps), inv_n=inv_n),
        out_shape=jax.ShapeDtypeStruct((B, 1), jnp.float32),
        grid_spec=pltpu.PrefetchScalarGridSpec(
            num_scalar_prefetch=0,
            grid=grid,
            in_specs=[pl.BlockSpec((tbr, tn), lambda b, n: (b, n))],
            out_specs=pl.BlockSpec((tbr, 1), lambda b, n: (b, 0)),
            scratch_shapes=[pltpu.VMEM((tbr, 1), jnp.float32)],
        ),
        compiler_params=pltpu.CompilerParams(
            dimension_semantics=("parallel", "arbitrary"),
            vmem_limit_bytes=int(min(max(need_a, 16 << 20), vmem_cap)),
        ),
        cost_estimate=pl.CostEstimate(
            flops=2 * B * N, transcendentals=B,
            bytes_accessed=B * N * itemsize + B * 4),
    )(x2)

    # ---- pass B: normalize + gain -------------------------------------------
    need_b = 4 * blk + 2 * tn * itemsize + tbr * tn * 4 + 4 * tbr * 4 + (2 << 20)
    out = pl.pallas_call(
        _scale_kernel,
        out_shape=jax.ShapeDtypeStruct((B, N), x2.dtype),
        grid_spec=pltpu.PrefetchScalarGridSpec(
            num_scalar_prefetch=0,
            grid=grid,
            in_specs=[
                pl.BlockSpec((tbr, tn), lambda b, n: (b, n)),
                pl.BlockSpec((tbr, 1), lambda b, n: (b, 0)),
                pl.BlockSpec((1, tn), lambda b, n: (0, n)),
            ],
            out_specs=pl.BlockSpec((tbr, tn), lambda b, n: (b, n)),
        ),
        compiler_params=pltpu.CompilerParams(
            dimension_semantics=("parallel", "parallel"),
            vmem_limit_bytes=int(min(max(need_b, 16 << 20), vmem_cap)),
        ),
        cost_estimate=pl.CostEstimate(
            flops=2 * B * N, transcendentals=0,
            bytes_accessed=2 * B * N * itemsize + N * itemsize + B * 4),
    )(x2, inv, w_row)
    return out


def modified_rms_norm(x, weight, eps=1e-5, *, force_two_pass=False):
    """x: (B, C, *spatial); weight: (C,). Matches ModifiedRMSNorm.forward."""
    orig_shape = x.shape
    B, C = orig_shape[0], orig_shape[1]
    spatial = 1
    for s in orig_shape[2:]:
        spatial *= s
    N = C * spatial
    itemsize = jnp.dtype(x.dtype).itemsize

    x2 = x.reshape(B, N)
    # Per-element weight row matching the flattened channel-major layout,
    # expanded and PRE-CAST to x.dtype once host-side (no per-step cast).
    w_row = jnp.repeat(weight, spatial).astype(x.dtype).reshape(1, N)

    block_budget, vmem_cap = _budgets()
    bytes_per_row = 4 * N * itemsize + 3 * N * 4   # dbuf in+out + f32 temps
    rows_fit = max(1, block_budget // bytes_per_row)
    tb = _pick_block_rows(B, rows_fit)

    can_tile_n = (N % 128 == 0) and (N // 128) >= 2
    row_too_big = bytes_per_row > block_budget
    grid_too_small = (B // tb) < 2 and N * itemsize >= (1 << 20)
    use_two_pass = can_tile_n and (force_two_pass or row_too_big or grid_too_small)

    if use_two_pass:
        out = _two_pass(x2, w_row, eps, block_budget, vmem_cap)
    else:
        # TODO(synk): if a single row exceeds the VMEM budget AND N is not a
        # multiple of 128 we still take the single-pass path; a masked-remainder
        # N-tiling would be needed to cover that ragged case.
        out = _single_pass(x2, w_row, tb, eps, vmem_cap)
    return out.reshape(orig_shape)


def modified_rms_norm_ref(x, weight, eps=1e-5):
    """Pure-JAX reference matching the PyTorch forward."""
    xf = x.astype(jnp.float32)
    dims = tuple(range(1, x.ndim))
    ms = jnp.mean(xf * xf, axis=dims, keepdims=True)
    y = (xf * jax.lax.rsqrt(ms + eps)).astype(x.dtype)
    shape = [1] * x.ndim
    shape[1] = -1
    return y * weight.reshape(shape).astype(x.dtype)


if __name__ == "__main__":
    key = jax.random.PRNGKey(0)
    B, C, H, W = 2, 4, 16, 16
    x = jax.random.normal(key, (B, C, H, W), dtype=jnp.float32)

    # deterministic parameter init: weight = w_init * ones(dim), w_init = 1.0
    w_init = 1.0
    weight = w_init * jnp.ones((C,), dtype=jnp.float32)

    ref = modified_rms_norm_ref(x, weight, eps=1e-5)

    # Default (single-pass, lane-dense rows) path.
    out = jax.block_until_ready(modified_rms_norm(x, weight, eps=1e-5))
    assert out.shape == (B, C, H, W)
    assert jnp.allclose(out, ref, atol=1e-5, rtol=1e-5), "single-pass mismatch"

    # Also exercise the N-tiled two-pass fallback (small-batch / huge-N path).
    out2 = jax.block_until_ready(
        modified_rms_norm(x, weight, eps=1e-5, force_two_pass=True))
    assert jnp.allclose(out2, ref, atol=1e-5, rtol=1e-5), "two-pass mismatch"

    print("KERNEL_OK")
</pallas_src>

<mosaic_0001>
module attributes {stable_mosaic.version = 11 : i64} {
  func.func @_mrmsnorm_kernel(%arg0: i32, %arg1: memref<2x1024xf32, #tpu.memory_space<vmem>>, %arg2: memref<1x1024xf32, #tpu.memory_space<vmem>>, %arg3: memref<2x1024xf32, #tpu.memory_space<vmem>>) attributes {dimension_semantics = [#tpu.dimension_semantics<parallel>], iteration_bounds = array<i64: 1>, scalar_prefetch = 0 : i64, scratch_operands = 0 : i64, tpu.core_type = #tpu.core_type<tc>, window_params = [{transform_indices = @transform_0, window_bounds = array<i64: 2, 1024>}, {pipeline_mode = #tpu.pipeline_mode<synchronous>, transform_indices = @transform_1, window_bounds = array<i64: 1, 1024>}, {transform_indices = @transform_2, window_bounds = array<i64: 2, 1024>}]} {
    %c0 = arith.constant 0 : index
    %c0_0 = arith.constant 0 : index
    %0 = vector.load %arg1[%c0, %c0_0] : memref<2x1024xf32, #tpu.memory_space<vmem>>, vector<2x1024xf32>
    %1 = arith.mulf %0, %0 : vector<2x1024xf32>
    %cst = arith.constant dense<0.000000e+00> : vector<2xf32>
    %2 = vector.multi_reduction <add>, %1, %cst [1] : vector<2x1024xf32> to vector<2xf32>
    %3 = vector.shape_cast %2 : vector<2xf32> to vector<2x1xf32>
    %cst_1 = arith.constant 9.765625E-4 : f32
    %4 = vector.broadcast %cst_1 : f32 to vector<2x1xf32>
    %5 = arith.mulf %3, %4 : vector<2x1xf32>
    %cst_2 = arith.constant 9.99999974E-6 : f32
    %6 = vector.broadcast %cst_2 : f32 to vector<2x1xf32>
    %7 = arith.addf %5, %6 : vector<2x1xf32>
    %8 = math.rsqrt %7 : vector<2x1xf32>
    %9 = vector.broadcast %8 : vector<2x1xf32> to vector<2x1024xf32>
    %10 = arith.mulf %0, %9 : vector<2x1024xf32>
    %c0_3 = arith.constant 0 : index
    %c0_4 = arith.constant 0 : index
    %11 = vector.load %arg2[%c0_3, %c0_4] : memref<1x1024xf32, #tpu.memory_space<vmem>>, vector<1x1024xf32>
    %12 = vector.broadcast %11 : vector<1x1024xf32> to vector<2x1024xf32>
    %13 = arith.mulf %10, %12 : vector<2x1024xf32>
    %c0_5 = arith.constant 0 : index
    %c0_6 = arith.constant 0 : index
    %14 = vector.load %arg3[%c0_5, %c0_6] : memref<2x1024xf32, #tpu.memory_space<vmem>>, vector<2x1024xf32>
    tpu.vector_store %arg3[%c0_5, %c0_6], %13 {strides = array<i32>} : memref<2x1024xf32, #tpu.memory_space<vmem>>, vector<2x1024xf32>,
    return
  }
  func.func @transform_0(%arg0: i32) -> (i32, i32) {
    %c0_i32 = arith.constant 0 : i32
    %c0_i32_0 = arith.constant 0 : i32
    return %arg0, %c0_i32 : i32, i32
  }
  func.func @transform_1(%arg0: i32) -> (i32, i32) {
    %c0_i32 = arith.constant 0 : i32
    %c0_i32_0 = arith.constant 0 : i32
    %c0_i32_1 = arith.constant 0 : i32
    return %c0_i32, %c0_i32_0 : i32, i32
  }
  func.func @transform_2(%arg0: i32) -> (i32, i32) {
    %c0_i32 = arith.constant 0 : i32
    %c0_i32_0 = arith.constant 0 : i32
    return %arg0, %c0_i32 : i32, i32
  }
}

module attributes {stable_mosaic.version = 11 : i64} {
  func.func @_mrmsnorm_kernel(%arg0: i32, %arg1: memref<2x1024xf32, #tpu.memory_space<vmem>>, %arg2: memref<1x1024xf32, #tpu.memory_space<vmem>>, %arg3: memref<2x1024xf32, #tpu.memory_space<vmem>>) attributes {dimension_semantics = [#tpu.dimension_semantics<parallel>], iteration_bounds = array<i64: 1>, scalar_prefetch = 0 : i64, scratch_operands = 0 : i64, tpu.core_type = #tpu.core_type<tc>, window_params = [{transform_indices = @transform_0, window_bounds = array<i64: 2, 1024>}, {pipeline_mode = #tpu.pipeline_mode<synchronous>, transform_indices = @transform_1, window_bounds = array<i64: 1, 1024>}, {transform_indices = @transform_2, window_bounds = array<i64: 2, 1024>}]} {
    %c0 = arith.constant 0 : index
    %c0_0 = arith.constant 0 : index
    %0 = vector.load %arg1[%c0, %c0_0] : memref<2x1024xf32, #tpu.memory_space<vmem>>, vector<2x1024xf32>
    %1 = arith.mulf %0, %0 : vector<2x1024xf32>
    %cst = arith.constant dense<0.000000e+00> : vector<2xf32>
    %2 = vector.multi_reduction <add>, %1, %cst [1] : vector<2x1024xf32> to vector<2xf32>
    %3 = vector.shape_cast %2 : vector<2xf32> to vector<2x1xf32>
    %cst_1 = arith.constant 9.765625E-4 : f32
    %4 = vector.broadcast %cst_1 : f32 to vector<2x1xf32>
    %5 = arith.mulf %3, %4 : vector<2x1xf32>
    %cst_2 = arith.constant 9.99999974E-6 : f32
    %6 = vector.broadcast %cst_2 : f32 to vector<2x1xf32>
    %7 = arith.addf %5, %6 : vector<2x1xf32>
    %8 = math.rsqrt %7 : vector<2x1xf32>
    %9 = vector.broadcast %8 : vector<2x1xf32> to vector<2x1024xf32>
    %10 = arith.mulf %0, %9 : vector<2x1024xf32>
    %c0_3 = arith.constant 0 : index
    %c0_4 = arith.constant 0 : index
    %11 = vector.load %arg2[%c0_3, %c0_4] : memref<1x1024xf32, #tpu.memory_space<vmem>>, vector<1x1024xf32>
    %12 = vector.broadcast %11 : vector<1x1024xf32> to vector<2x1024xf32>
    %13 = arith.mulf %10, %12 : vector<2x1024xf32>
    %c0_5 = arith.constant 0 : index
    %c0_6 = arith.constant 0 : index
    %14 = vector.load %arg3[%c0_5, %c0_6] : memref<2x1024xf32, #tpu.memory_space<vmem>>, vector<2x1024xf32>
    tpu.vector_store %arg3[%c0_5, %c0_6], %13 {strides = array<i32>} : memref<2x1024xf32, #tpu.memory_space<vmem>>, vector<2x1024xf32>,
    return
  }
  func.func @transform_0(%arg0: i32) -> (i32, i32) {
    %c0_i32 = arith.constant 0 : i32
    %c0_i32_0 = arith.constant 0 : i32
    return %arg0, %c0_i32 : i32, i32
  }
  func.func @transform_1(%arg0: i32) -> (i32, i32) {
    %c0_i32 = arith.constant 0 : i32
    %c0_i32_0 = arith.constant 0 : i32
    %c0_i32_1 = arith.constant 0 : i32
    return %c0_i32, %c0_i32_0 : i32, i32
  }
  func.func @transform_2(%arg0: i32) -> (i32, i32) {
    %c0_i32 = arith.constant 0 : i32
    %c0_i32_0 = arith.constant 0 : i32
    return %arg0, %c0_i32 : i32, i32
  }
}

</mosaic_0001>

<llo_original>
// kernel: tpu_custom_call.1
$region0: #{tpu_custom_call.1}
  #allocation0 [shape = 'u32[]', space=smem, size = 0x4, offset = 0x4, fixed_abs, tag = 'smem constant byte address 0x4 - core index']
  #allocation1 [shape = 'u32[144,128]{1,0:T(1,128)}', space=vmem, size = 0x12000, scoped, tag = 'internal scratch']
  %s0 = inlined_call_operand.hbm [shape: f32[2,1024], index: 0, kind: input, shape index: {}]
  %s1 = inlined_call_operand.hbm [shape: f32[1,1024], index: 1, kind: input, shape index: {}]
  %s2 = inlined_call_operand.hbm [shape: f32[2,1024], index: 2, kind: output, shape index: {}]
  %s3 = sld [smem:[#allocation0]]
  $region26: #{tpu_custom_call.1} parent=0
    _
  %s5 = ssub.s32 1, %s3
  %s6 = scalar_select 0, %s5, %s3
  $region1: #{tpu_custom_call.1} parent=0
    #allocation2 [shape = 'u8[8192]{0}', space=vmem, size = 0x2000, scoped, tag = 'input window, operand 0, single buffered']
    #allocation3 [shape = 's32[1]{0}', space=sflag, size = 0x4, scoped, tag = 'scoped memory for tpu_custom_call.1']
    #allocation4 [shape = 's32[1]{0}', space=sflag, size = 0x4, scoped, tag = 'scoped memory for tpu_custom_call.1']
    #allocation5 [shape = 'u8[4096]{0}', space=vmem, size = 0x1000, scoped, tag = 'input window, operand 1, single buffered']
    #allocation6 [shape = 's32[1]{0}', space=sflag, size = 0x4, scoped, tag = 'scoped memory for tpu_custom_call.1']
    #allocation7 [shape = 'u8[8192]{0}', space=vmem, size = 0x2000, scoped, tag = 'output window, operand 0, single buffered']
    %7 = vsyncpa [#allocation3], 0
    %8 = vsyncpa [#allocation6], 0
    %9 = vsyncpa [#allocation4], 0
    // Predicated region
    $region2: #{tpu_custom_call.1} parent=1 // pred_check
      _
    $region3: #{tpu_custom_call.1} parent=1 // pred_check_branch
      %11 = sbr.rel (0) target = $region5
    $region4: #{tpu_custom_call.1} parent=1 // pred_region
      %s13 = ssub.s32 256, 256
      %14 = vsyncadd [#allocation3], %s13
      %s16 = sshll.u32 [#allocation2], 4
      %s17 = int_to_ptr.vmem [resolvable:$true] %s16
      %19 = dma.hbm_to_vmem [thread:$0]  %s0, 256, %s17, [#allocation3]
    $region5: #{tpu_custom_call.1} parent=1 // pred_fallthru
      _
    // Predicated region
    $region6: #{tpu_custom_call.1} parent=1 // pred_check
      _
    $region7: #{tpu_custom_call.1} parent=1 // pred_check_branch
      %21 = sbr.rel (0) target = $region9
    $region8: #{tpu_custom_call.1} parent=1 // pred_region
      %s23 = ssub.s32 128, 128
      %24 = vsyncadd [#allocation6], %s23
      %s26 = sshll.u32 [#allocation5], 4
      %s27 = int_to_ptr.vmem [resolvable:$true] %s26
      %29 = dma.hbm_to_vmem [thread:$0]  %s1, 128, %s27, [#allocation6]
    $region9: #{tpu_custom_call.1} parent=1 // pred_fallthru
      _
    // Predicated region
    $region10: #{tpu_custom_call.1} parent=1 // pred_check
      _
    $region11: #{tpu_custom_call.1} parent=1 // pred_check_branch
      %31 = sbr.rel (0) target = $region13
    $region12: #{tpu_custom_call.1} parent=1 // pred_region
      %32 = dma.done [#allocation3], 256
    $region13: #{tpu_custom_call.1} parent=1 // pred_fallthru
      _
    // Predicated region
    $region14: #{tpu_custom_call.1} parent=1 // pred_check
      _
    $region15: #{tpu_custom_call.1} parent=1 // pred_check_branch
      %34 = sbr.rel (0) target = $region17
    $region16: #{tpu_custom_call.1} parent=1 // pred_region
      %35 = dma.done [#allocation6], 128
    $region17: #{tpu_custom_call.1} parent=1 // pred_fallthru
      _
    %v36 = vld [vmem:[#allocation2] sm:$0xff]
    %v37 = vld [vmem:[#allocation2 + $0x8] sm:$0xff]
    %v38 = vmul.f32 %v36, %v36
    %v39 = vmul.f32 %v37, %v37
    %v42 = vcombine.high %v38, %v38
    %v44 = vunpack.c.l.s4 1983009808
    %v45 = vunpack.c.0.s8 %v44
    %v46 = vlaneseq
    %v47 = vshrl.u32 %v46, 7
    %v48 = vsub.s32 %v45, %v47
    %v49 = vrot.slane %v38, %v48
    %v51 = vunpack.c.l.s4 1983009808
    %v52 = vunpack.c.0.s8 %v51
    %v53 = vlaneseq
    %v54 = vshrl.u32 %v53, 7
    %v55 = vsub.s32 %v52, %v54
    %v56 = vrot.slane %v42, %v55
    %v57 = vcombine.high %v49, %v49
    %v58 = vcombine.high %v56, %v56
    %v59 = vcombine.high %v39, %v39
    %v61 = vunpack.c.l.s4 1983009808
    %v62 = vunpack.c.0.s8 %v61
    %v63 = vlaneseq
    %v64 = vshrl.u32 %v63, 7
    %v65 = vsub.s32 %v62, %v64
    %v66 = vrot.slane %v39, %v65
    %v68 = vunpack.c.l.s4 1983009808
    %v69 = vunpack.c.0.s8 %v68
    %v70 = vlaneseq
    %v71 = vshrl.u32 %v70, 7
    %v72 = vsub.s32 %v69, %v71
    %v73 = vrot.slane %v59, %v72
    %v74 = vcombine.high %v66, %v66
    %v75 = vcombine.high %v73, %v73
    %vm84 = vcmask 1041408
    %v85 = vsel %vm84, %v49, 0.0
    %v86 = vsel %vm84, %v57, 0.0
    %v87 = vadd.f32 %v85, %v86
    %v88 = vsel %vm84, %v56, 0.0
    %v89 = vadd.f32 %v87, %v88
    %v90 = vsel %vm84, %v58, 0.0
    %v91 = vadd.f32 %v89, %v90
    %v92 = vsel %vm84, %v66, 0.0
    %v93 = vadd.f32 %v91, %v92
    %v94 = vsel %vm84, %v74, 0.0
    %v95 = vadd.f32 %v93, %v94
    %v96 = vsel %vm84, %v73, 0.0
    %v97 = vadd.f32 %v95, %v96
    %v98 = vsel %vm84, %v75, 0.0
    %v99 = vadd.f32 %v97, %v98
    %100 = vadd.xlane.f32.xlu0 %v99
    %v101 = vpop.xlane.xlu0 %100
    %v102 = vmul.f32 %v101, 0.0009765625
    %v103 = vadd.f32 %v102, 1e-05
    %v104 = vrsqrt.pop %v103
    %v107 = vunpack.c.l.s4 269488144
    %v108 = vunpack.c.0.s8 %v107
    %v109 = vlaneseq
    %v110 = vshrl.u32 %v109, 7
    %v111 = vsub.s32 %v108, %v110
    %v112 = vrot.slane %v104, %v111
    %v114 = vmul.f32 %v36, %v112
    %v115 = vmul.f32 %v37, %v112
    %v116 = vld [vmem:[#allocation5] sm:$0xff]
    %v118 = vlaneseq
    %v119 = vshrl.u32 %v118, 7
    %v120 = vsub.s32 0, %v119
    %v121 = vrot.slane %v116, %v120
    %v122 = vlaneseq
    %v123 = vshrl.u32 %v122, 7
    %v124 = vsub.s32 1, %v123
    %v125 = vrot.slane %v116, %v124
    %v126 = vlaneseq
    %v127 = vshrl.u32 %v126, 7
    %v128 = vsub.s32 2, %v127
    %v129 = vrot.slane %v116, %v128
    %v130 = vlaneseq
    %v131 = vshrl.u32 %v130, 7
    %v132 = vsub.s32 3, %v131
    %v133 = vrot.slane %v116, %v132
    %v134 = vlaneseq
    %v135 = vshrl.u32 %v134, 7
    %v136 = vsub.s32 4, %v135
    %v137 = vrot.slane %v116, %v136
    %v138 = vlaneseq
    %v139 = vshrl.u32 %v138, 7
    %v140 = vsub.s32 5, %v139
    %v141 = vrot.slane %v116, %v140
    %v142 = vlaneseq
    %v143 = vshrl.u32 %v142, 7
    %v144 = vsub.s32 6, %v143
    %v145 = vrot.slane %v116, %v144
    %v146 = vlaneseq
    %v147 = vshrl.u32 %v146, 7
    %v148 = vsub.s32 7, %v147
    %v149 = vrot.slane %v116, %v148
    %v150 = vcombine.low %v121, %v125
    %v151 = vcombine.low %v129, %v133
    %v153 = vunpack.c.l.s4 1983009808
    %v154 = vunpack.c.0.s8 %v153
    %v155 = vlaneseq
    %v156 = vshrl.u32 %v155, 7
    %v157 = vsub.s32 %v154, %v156
    %v158 = vrot.slane %v150, %v157
    %v160 = vunpack.c.l.s4 1983009808
    %v161 = vunpack.c.0.s8 %v160
    %v162 = vlaneseq
    %v163 = vshrl.u32 %v162, 7
    %v164 = vsub.s32 %v161, %v163
    %v165 = vrot.slane %v151, %v164
    %v166 = vcombine.low %v158, %v165
    %v167 = vcombine.low %v137, %v141
    %v168 = vcombine.low %v145, %v149
    %v170 = vunpack.c.l.s4 1983009808
    %v171 = vunpack.c.0.s8 %v170
    %v172 = vlaneseq
    %v173 = vshrl.u32 %v172, 7
    %v174 = vsub.s32 %v171, %v173
    %v175 = vrot.slane %v167, %v174
    %v177 = vunpack.c.l.s4 1983009808
    %v178 = vunpack.c.0.s8 %v177
    %v179 = vlaneseq
    %v180 = vshrl.u32 %v179, 7
    %v181 = vsub.s32 %v178, %v180
    %v182 = vrot.slane %v168, %v181
    %v183 = vcombine.low %v175, %v182
    %v186 = vmul.f32 %v114, %v166
    %v187 = vmul.f32 %v115, %v183
    %188 = vst [vmem:[#allocation7] sm:$0xff] %v186
    %189 = vst [vmem:[#allocation7 + $0x8] sm:$0xff] %v187
    // Predicated region
    $region18: #{tpu_custom_call.1} parent=1 // pred_check
      _
    $region19: #{tpu_custom_call.1} parent=1 // pred_check_branch
      %191 = sbr.rel (0) target = $region21
    $region20: #{tpu_custom_call.1} parent=1 // pred_region
      %s193 = ssub.s32 256, 256
      %194 = vsyncadd [#allocation4], %s193
      %s196 = sshll.u32 [#allocation7], 4
      %s197 = int_to_ptr.vmem [resolvable:$true] %s196
      %199 = dma.vmem_to_hbm [thread:$0]  %s197, 256, %s2, [#allocation4]
    $region21: #{tpu_custom_call.1} parent=1 // pred_fallthru
      _
    // Predicated region
    $region22: #{tpu_custom_call.1} parent=1 // pred_check
      _
    $region23: #{tpu_custom_call.1} parent=1 // pred_check_branch
      %201 = sbr.rel (0) target = $region25
    $region24: #{tpu_custom_call.1} parent=1 // pred_region
      %202 = dma.done [#allocation4], 256
    $region25: #{tpu_custom_call.1} parent=1 // pred_fallthru
      _
    %203 = vsyncpa [#allocation3], 1
    %204 = vsyncpa [#allocation6], 1
    %205 = vsyncpa [#allocation4], 1

// kernel: tpu_custom_call.1
$region0: #{tpu_custom_call.1}
  #allocation0 [shape = 'u32[]', space=smem, size = 0x4, offset = 0x4, fixed_abs, tag = 'smem constant byte address 0x4 - core index']
  #allocation1 [shape = 'u32[144,128]{1,0:T(1,128)}', space=vmem, size = 0x12000, scoped, tag = 'internal scratch']
  %s0 = inlined_call_operand.hbm [shape: f32[2,1024], index: 0, kind: input, shape index: {}]
  %s1 = inlined_call_operand.hbm [shape: f32[1,1024], index: 1, kind: input, shape index: {}]
  %s2 = inlined_call_operand.hbm [shape: f32[2,1024], index: 2, kind: output, shape index: {}]
  %s3 = sld [smem:[#allocation0]]
  $region26: #{tpu_custom_call.1} parent=0
    _
  %s5 = ssub.s32 1, %s3
  %s6 = scalar_select 0, %s5, %s3
  $region1: #{tpu_custom_call.1} parent=0
    #allocation2 [shape = 'u8[8192]{0}', space=vmem, size = 0x2000, scoped, tag = 'input window, operand 0, single buffered']
    #allocation3 [shape = 's32[1]{0}', space=sflag, size = 0x4, scoped, tag = 'scoped memory for tpu_custom_call.1']
    #allocation4 [shape = 's32[1]{0}', space=sflag, size = 0x4, scoped, tag = 'scoped memory for tpu_custom_call.1']
    #allocation5 [shape = 'u8[4096]{0}', space=vmem, size = 0x1000, scoped, tag = 'input window, operand 1, single buffered']
    #allocation6 [shape = 's32[1]{0}', space=sflag, size = 0x4, scoped, tag = 'scoped memory for tpu_custom_call.1']
    #allocation7 [shape = 'u8[8192]{0}', space=vmem, size = 0x2000, scoped, tag = 'output window, operand 0, single buffered']
    %7 = vsyncpa [#allocation3], 0
    %8 = vsyncpa [#allocation6], 0
    %9 = vsyncpa [#allocation4], 0
    // Predicated region
    $region2: #{tpu_custom_call.1} parent=1 // pred_check
      _
    $region3: #{tpu_custom_call.1} parent=1 // pred_check_branch
      %11 = sbr.rel (0) target = $region5
    $region4: #{tpu_custom_call.1} parent=1 // pred_region
      %s13 = ssub.s32 256, 256
      %14 = vsyncadd [#allocation3], %s13
      %s16 = sshll.u32 [#allocation2], 4
      %s17 = int_to_ptr.vmem [resolvable:$true] %s16
      %19 = dma.hbm_to_vmem [thread:$0]  %s0, 256, %s17, [#allocation3]
    $region5: #{tpu_custom_call.1} parent=1 // pred_fallthru
      _
    // Predicated region
    $region6: #{tpu_custom_call.1} parent=1 // pred_check
      _
    $region7: #{tpu_custom_call.1} parent=1 // pred_check_branch
      %21 = sbr.rel (0) target = $region9
    $region8: #{tpu_custom_call.1} parent=1 // pred_region
      %s23 = ssub.s32 128, 128
      %24 = vsyncadd [#allocation6], %s23
      %s26 = sshll.u32 [#allocation5], 4
      %s27 = int_to_ptr.vmem [resolvable:$true] %s26
      %29 = dma.hbm_to_vmem [thread:$0]  %s1, 128, %s27, [#allocation6]
    $region9: #{tpu_custom_call.1} parent=1 // pred_fallthru
      _
    // Predicated region
    $region10: #{tpu_custom_call.1} parent=1 // pred_check
      _
    $region11: #{tpu_custom_call.1} parent=1 // pred_check_branch
      %31 = sbr.rel (0) target = $region13
    $region12: #{tpu_custom_call.1} parent=1 // pred_region
      %32 = dma.done [#allocation3], 256
    $region13: #{tpu_custom_call.1} parent=1 // pred_fallthru
      _
    // Predicated region
    $region14: #{tpu_custom_call.1} parent=1 // pred_check
      _
    $region15: #{tpu_custom_call.1} parent=1 // pred_check_branch
      %34 = sbr.rel (0) target = $region17
    $region16: #{tpu_custom_call.1} parent=1 // pred_region
      %35 = dma.done [#allocation6], 128
    $region17: #{tpu_custom_call.1} parent=1 // pred_fallthru
      _
    %v36 = vld [vmem:[#allocation2] sm:$0xff]
    %v37 = vld [vmem:[#allocation2 + $0x8] sm:$0xff]
    %v38 = vmul.f32 %v36, %v36
    %v39 = vmul.f32 %v37, %v37
    %v42 = vcombine.high %v38, %v38
    %v44 = vunpack.c.l.s4 1983009808
    %v45 = vunpack.c.0.s8 %v44
    %v46 = vlaneseq
    %v47 = vshrl.u32 %v46, 7
    %v48 = vsub.s32 %v45, %v47
    %v49 = vrot.slane %v38, %v48
    %v51 = vunpack.c.l.s4 1983009808
    %v52 = vunpack.c.0.s8 %v51
    %v53 = vlaneseq
    %v54 = vshrl.u32 %v53, 7
    %v55 = vsub.s32 %v52, %v54
    %v56 = vrot.slane %v42, %v55
    %v57 = vcombine.high %v49, %v49
    %v58 = vcombine.high %v56, %v56
    %v59 = vcombine.high %v39, %v39
    %v61 = vunpack.c.l.s4 1983009808
    %v62 = vunpack.c.0.s8 %v61
    %v63 = vlaneseq
    %v64 = vshrl.u32 %v63, 7
    %v65 = vsub.s32 %v62, %v64
    %v66 = vrot.slane %v39, %v65
    %v68 = vunpack.c.l.s4 1983009808
    %v69 = vunpack.c.0.s8 %v68
    %v70 = vlaneseq
    %v71 = vshrl.u32 %v70, 7
    %v72 = vsub.s32 %v69, %v71
    %v73 = vrot.slane %v59, %v72
    %v74 = vcombine.high %v66, %v66
    %v75 = vcombine.high %v73, %v73
    %vm84 = vcmask 1041408
    %v85 = vsel %vm84, %v49, 0.0
    %v86 = vsel %vm84, %v57, 0.0
    %v87 = vadd.f32 %v85, %v86
    %v88 = vsel %vm84, %v56, 0.0
    %v89 = vadd.f32 %v87, %v88
    %v90 = vsel %vm84, %v58, 0.0
    %v91 = vadd.f32 %v89, %v90
    %v92 = vsel %vm84, %v66, 0.0
    %v93 = vadd.f32 %v91, %v92
    %v94 = vsel %vm84, %v74, 0.0
    %v95 = vadd.f32 %v93, %v94
    %v96 = vsel %vm84, %v73, 0.0
    %v97 = vadd.f32 %v95, %v96
    %v98 = vsel %vm84, %v75, 0.0
    %v99 = vadd.f32 %v97, %v98
    %100 = vadd.xlane.f32.xlu0 %v99
    %v101 = vpop.xlane.xlu0 %100
    %v102 = vmul.f32 %v101, 0.0009765625
    %v103 = vadd.f32 %v102, 1e-05
    %v104 = vrsqrt.pop %v103
    %v107 = vunpack.c.l.s4 269488144
    %v108 = vunpack.c.0.s8 %v107
    %v109 = vlaneseq
    %v110 = vshrl.u32 %v109, 7
    %v111 = vsub.s32 %v108, %v110
    %v112 = vrot.slane %v104, %v111
    %v114 = vmul.f32 %v36, %v112
    %v115 = vmul.f32 %v37, %v112
    %v116 = vld [vmem:[#allocation5] sm:$0xff]
    %v118 = vlaneseq
    %v119 = vshrl.u32 %v118, 7
    %v120 = vsub.s32 0, %v119
    %v121 = vrot.slane %v116, %v120
    %v122 = vlaneseq
    %v123 = vshrl.u32 %v122, 7
    %v124 = vsub.s32 1, %v123
    %v125 = vrot.slane %v116, %v124
    %v126 = vlaneseq
    %v127 = vshrl.u32 %v126, 7
    %v128 = vsub.s32 2, %v127
    %v129 = vrot.slane %v116, %v128
    %v130 = vlaneseq
    %v131 = vshrl.u32 %v130, 7
    %v132 = vsub.s32 3, %v131
    %v133 = vrot.slane %v116, %v132
    %v134 = vlaneseq
    %v135 = vshrl.u32 %v134, 7
    %v136 = vsub.s32 4, %v135
    %v137 = vrot.slane %v116, %v136
    %v138 = vlaneseq
    %v139 = vshrl.u32 %v138, 7
    %v140 = vsub.s32 5, %v139
    %v141 = vrot.slane %v116, %v140
    %v142 = vlaneseq
    %v143 = vshrl.u32 %v142, 7
    %v144 = vsub.s32 6, %v143
    %v145 = vrot.slane %v116, %v144
    %v146 = vlaneseq
    %v147 = vshrl.u32 %v146, 7
    %v148 = vsub.s32 7, %v147
    %v149 = vrot.slane %v116, %v148
    %v150 = vcombine.low %v121, %v125
    %v151 = vcombine.low %v129, %v133
    %v153 = vunpack.c.l.s4 1983009808
    %v154 = vunpack.c.0.s8 %v153
    %v155 = vlaneseq
    %v156 = vshrl.u32 %v155, 7
    %v157 = vsub.s32 %v154, %v156
    %v158 = vrot.slane %v150, %v157
    %v160 = vunpack.c.l.s4 1983009808
    %v161 = vunpack.c.0.s8 %v160
    %v162 = vlaneseq
    %v163 = vshrl.u32 %v162, 7
    %v164 = vsub.s32 %v161, %v163
    %v165 = vrot.slane %v151, %v164
    %v166 = vcombine.low %v158, %v165
    %v167 = vcombine.low %v137, %v141
    %v168 = vcombine.low %v145, %v149
    %v170 = vunpack.c.l.s4 1983009808
    %v171 = vunpack.c.0.s8 %v170
    %v172 = vlaneseq
    %v173 = vshrl.u32 %v172, 7
    %v174 = vsub.s32 %v171, %v173
    %v175 = vrot.slane %v167, %v174
    %v177 = vunpack.c.l.s4 1983009808
    %v178 = vunpack.c.0.s8 %v177
    %v179 = vlaneseq
    %v180 = vshrl.u32 %v179, 7
    %v181 = vsub.s32 %v178, %v180
    %v182 = vrot.slane %v168, %v181
    %v183 = vcombine.low %v175, %v182
    %v186 = vmul.f32 %v114, %v166
    %v187 = vmul.f32 %v115, %v183
    %188 = vst [vmem:[#allocation7] sm:$0xff] %v186
    %189 = vst [vmem:[#allocation7 + $0x8] sm:$0xff] %v187
    // Predicated region
    $region18: #{tpu_custom_call.1} parent=1 // pred_check
      _
    $region19: #{tpu_custom_call.1} parent=1 // pred_check_branch
      %191 = sbr.rel (0) target = $region21
    $region20: #{tpu_custom_call.1} parent=1 // pred_region
      %s193 = ssub.s32 256, 256
      %194 = vsyncadd [#allocation4], %s193
      %s196 = sshll.u32 [#allocation7], 4
      %s197 = int_to_ptr.vmem [resolvable:$true] %s196
      %199 = dma.vmem_to_hbm [thread:$0]  %s197, 256, %s2, [#allocation4]
    $region21: #{tpu_custom_call.1} parent=1 // pred_fallthru
      _
    // Predicated region
    $region22: #{tpu_custom_call.1} parent=1 // pred_check
      _
    $region23: #{tpu_custom_call.1} parent=1 // pred_check_branch
      %201 = sbr.rel (0) target = $region25
    $region24: #{tpu_custom_call.1} parent=1 // pred_region
      %202 = dma.done [#allocation4], 256
    $region25: #{tpu_custom_call.1} parent=1 // pred_fallthru
      _
    %203 = vsyncpa [#allocation3], 1
    %204 = vsyncpa [#allocation6], 1
    %205 = vsyncpa [#allocation4], 1

</llo_original>
